<compile_context>
chip_gen: v7x
topology: tpu7x:2x2x1
jax: 0.10.0
libtpu: 0.0.40
codegen_flags: <defaults>
</compile_context>

<pallas_src>
import functools
from math import sqrt

import jax
import jax.numpy as jnp
from jax.experimental import pallas as pl
from jax.experimental.pallas import tpu as pltpu

# ----------------------------- model configuration -----------------------------
SEQ_LEN = 16          # tokens including [CLS]/[SEP]
HIDDEN = 128          # lane-dense hidden size
NUM_HEADS = 4
HEAD_DIM = HIDDEN // NUM_HEADS
FFN_DIM = 512
NUM_LAYERS = 2
VOCAB = 1000
MAX_POS = 64
LN_EPS = 1e-12

_VMEM = pl.BlockSpec(memory_space=pltpu.MemorySpace.VMEM)


# ------------------------- shared math (kernel + reference) --------------------
def _mm(a, b):
    """MXU matmul: bf16 operands, f32 accumulation."""
    return jnp.dot(a.astype(jnp.bfloat16), b.astype(jnp.bfloat16),
                   preferred_element_type=jnp.float32)


def _mm_nt(a, b):
    """a @ b.T (contract last dims of both) without an explicit transpose."""
    return jax.lax.dot_general(
        a.astype(jnp.bfloat16), b.astype(jnp.bfloat16),
        dimension_numbers=(((1,), (1,)), ((), ())),
        preferred_element_type=jnp.float32)


def _layernorm(x, g, b):
    mu = jnp.mean(x, axis=-1, keepdims=True)
    var = jnp.mean(jnp.square(x - mu), axis=-1, keepdims=True)
    return (x - mu) * jax.lax.rsqrt(var + LN_EPS) * g + b


def _gelu(x):
    c = 0.7978845608028654  # sqrt(2/pi)
    return 0.5 * x * (1.0 + jnp.tanh(c * (x + 0.044715 * x * x * x)))


def _softmax(s):
    s = s - jnp.max(s, axis=-1, keepdims=True)
    e = jnp.exp(s)
    return e / jnp.sum(e, axis=-1, keepdims=True)


# ------------------------------ Pallas kernels ----------------------------------
def _ln_kernel(x_ref, g_ref, b_ref, o_ref):
    o_ref[...] = _layernorm(x_ref[...], g_ref[...], b_ref[...]).astype(o_ref.dtype)


def layernorm_pallas(x, g, b):
    S, H = x.shape
    return pl.pallas_call(
        _ln_kernel,
        out_shape=jax.ShapeDtypeStruct((S, H), x.dtype),
        in_specs=[_VMEM, _VMEM, _VMEM],
        out_specs=_VMEM,
        cost_estimate=pl.CostEstimate(
            flops=8 * S * H, transcendentals=S,
            bytes_accessed=4 * (2 * S * H + 2 * H)),
    )(x, g, b)


def _make_bert_layer_kernel(num_heads, head_dim):
    scale = 1.0 / sqrt(head_dim)

    def kernel(x_ref, wq_ref, bq_ref, wk_ref, bk_ref, wv_ref, bv_ref,
               wo_ref, bo_ref, ln1g_ref, ln1b_ref,
               wi_ref, bi_ref, wf_ref, bf_ref, ln2g_ref, ln2b_ref, o_ref):
        x = x_ref[...]
        S = x.shape[0]
        H = wo_ref.shape[1]

        # --- multi-head self-attention (attention_mask == all ones -> no masking) ---
        q = _mm(x, wq_ref[...]) + bq_ref[...]
        k = _mm(x, wk_ref[...]) + bk_ref[...]
        v = _mm(x, wv_ref[...]) + bv_ref[...]

        # Fuse the head-concat into the output projection: for each head h,
        # ctx_h @ Wo[h*hd:(h+1)*hd, :] and accumulate (block matmul identity).
        attn = jnp.zeros((S, H), jnp.float32)
        for h in range(num_heads):          # static unroll over heads
            sl = slice(h * head_dim, (h + 1) * head_dim)
            p = _softmax(_mm_nt(q[:, sl], k[:, sl]) * scale)   # [S, S]
            ctx_h = _mm(p, v[:, sl])                            # [S, hd]
            attn = attn + _mm(ctx_h, wo_ref[sl, :])             # [S, H]
        attn = attn + bo_ref[...]

        h1 = _layernorm(x + attn, ln1g_ref[...], ln1b_ref[...])

        # --- feed-forward ---
        inter = _gelu(_mm(h1, wi_ref[...]) + bi_ref[...])
        ffn = _mm(inter, wf_ref[...]) + bf_ref[...]
        o_ref[...] = _layernorm(h1 + ffn, ln2g_ref[...], ln2b_ref[...]).astype(o_ref.dtype)

    return kernel


def bert_layer_pallas(x, lp, *, num_heads=NUM_HEADS):
    S, H = x.shape
    F = lp["wi"].shape[1]
    head_dim = H // num_heads
    flops = 2 * S * H * (4 * H + 2 * S + 2 * F)
    transcendentals = S * S * num_heads + S * F + 4 * S
    bytes_accessed = 4 * (2 * S * H + 4 * H * H + 2 * H * F + 10 * H + F)
    kernel = _make_bert_layer_kernel(num_heads, head_dim)
    return pl.pallas_call(
        kernel,
        out_shape=jax.ShapeDtypeStruct((S, H), x.dtype),
        in_specs=[_VMEM] * 17,
        out_specs=_VMEM,
        cost_estimate=pl.CostEstimate(
            flops=flops, transcendentals=transcendentals,
            bytes_accessed=bytes_accessed),
    )(x, lp["wq"], lp["bq"], lp["wk"], lp["bk"], lp["wv"], lp["bv"],
      lp["wo"], lp["bo"], lp["ln1_g"], lp["ln1_b"],
      lp["wi"], lp["bi"], lp["wf"], lp["bf"], lp["ln2_g"], lp["ln2_b"])


# ------------------------------ parameters --------------------------------------
def init_bert_params(key, *, vocab=VOCAB, max_pos=MAX_POS, hidden=HIDDEN,
                     ffn=FFN_DIM, num_layers=NUM_LAYERS, dtype=jnp.float32):
    keys = jax.random.split(key, 3 + 6 * num_layers)
    std = 0.02

    def dense(k, fan_in, fan_out):
        return (std * jax.random.normal(k, (fan_in, fan_out), dtype),
                jnp.zeros((1, fan_out), dtype))

    params = {
        "word_emb": std * jax.random.normal(keys[0], (vocab, hidden), dtype),
        "pos_emb": std * jax.random.normal(keys[1], (max_pos, hidden), dtype),
        "type_emb": std * jax.random.normal(keys[2], (2, hidden), dtype),
        "emb_ln_g": jnp.ones((1, hidden), dtype),
        "emb_ln_b": jnp.zeros((1, hidden), dtype),
        "layers": [],
    }
    kit = iter(keys[3:])
    ones = jnp.ones((1, hidden), dtype)
    zeros = jnp.zeros((1, hidden), dtype)
    for _ in range(num_layers):
        wq, bq = dense(next(kit), hidden, hidden)
        wk, bk = dense(next(kit), hidden, hidden)
        wv, bv = dense(next(kit), hidden, hidden)
        wo, bo = dense(next(kit), hidden, hidden)
        wi, bi = dense(next(kit), hidden, ffn)
        wf, bf = dense(next(kit), ffn, hidden)
        params["layers"].append(dict(
            wq=wq, bq=bq, wk=wk, bk=bk, wv=wv, bv=bv, wo=wo, bo=bo,
            ln1_g=ones, ln1_b=zeros,
            wi=wi, bi=bi, wf=wf, bf=bf,
            ln2_g=ones, ln2_b=zeros))
    return params


# ------------------------------ forward passes -----------------------------------
def encoding_bert_layer_pallas(token_ids, params, *, num_heads=NUM_HEADS):
    L = token_ids.shape[0]
    # Embedding gather done in plain JAX (data-dependent gather), token_type_ids == 0.
    emb = (jnp.take(params["word_emb"], token_ids, axis=0)
           + params["pos_emb"][:L]
           + params["type_emb"][0][None, :])
    h = layernorm_pallas(emb, params["emb_ln_g"], params["emb_ln_b"])
    for lp in params["layers"]:
        h = bert_layer_pallas(h, lp, num_heads=num_heads)
    # self.dropout(last_hidden_state[0][1:-1]) -- eval-mode dropout == identity
    return h[1:-1]


def encoding_bert_layer_ref(token_ids, params, *, num_heads=NUM_HEADS):
    """Pure-JAX reference with identical precision policy (bf16 MXU operands, f32 acc)."""
    L = token_ids.shape[0]
    x = (jnp.take(params["word_emb"], token_ids, axis=0)
         + params["pos_emb"][:L]
         + params["type_emb"][0][None, :])
    x = _layernorm(x, params["emb_ln_g"], params["emb_ln_b"])
    head_dim = x.shape[1] // num_heads
    scale = 1.0 / sqrt(head_dim)
    for lp in params["layers"]:
        q = _mm(x, lp["wq"]) + lp["bq"]
        k = _mm(x, lp["wk"]) + lp["bk"]
        v = _mm(x, lp["wv"]) + lp["bv"]
        heads = []
        for h in range(num_heads):
            sl = slice(h * head_dim, (h + 1) * head_dim)
            p = _softmax(_mm_nt(q[:, sl], k[:, sl]) * scale)
            heads.append(_mm(p, v[:, sl]))
        ctx = jnp.concatenate(heads, axis=-1)
        attn = _mm(ctx, lp["wo"]) + lp["bo"]
        h1 = _layernorm(x + attn, lp["ln1_g"], lp["ln1_b"])
        inter = _gelu(_mm(h1, lp["wi"]) + lp["bi"])
        x = _layernorm(h1 + _mm(inter, lp["wf"]) + lp["bf"], lp["ln2_g"], lp["ln2_b"])
    return x[1:-1]


# ------------------------------------ main ----------------------------------------
if __name__ == "__main__":
    # TODO(synk): BertTokenizer (WordPiece) + pretrained bert-base-uncased weights cannot
    # be reproduced in-script (no files/network); deterministic random token ids and
    # randomly-initialized weights stand in for them.
    # TODO(synk): nn.Dropout is implemented as eval-mode identity (no RNG mask).
    key = jax.random.PRNGKey(0)
    k_tok, k_par = jax.random.split(key)
    token_ids = jax.random.randint(k_tok, (SEQ_LEN,), 0, VOCAB, dtype=jnp.int32)
    params = init_bert_params(k_par)

    out = encoding_bert_layer_pallas(token_ids, params)
    out = jax.block_until_ready(out)

    ref = encoding_bert_layer_ref(token_ids, params)
    assert out.shape == (SEQ_LEN - 2, HIDDEN), out.shape
    max_err = float(jnp.max(jnp.abs(out - ref)))
    assert jnp.allclose(out, ref, atol=1e-2, rtol=1e-2), f"max abs err {max_err}"

    print("KERNEL_OK")
</pallas_src>

<mosaic_0001>
module attributes {stable_mosaic.version = 11 : i64} {
  func.func @_ln_kernel(%arg0: memref<16x128xf32, #tpu.memory_space<vmem>>, %arg1: memref<1x128xf32, #tpu.memory_space<vmem>>, %arg2: memref<1x128xf32, #tpu.memory_space<vmem>>, %arg3: memref<16x128xf32, #tpu.memory_space<vmem>>) attributes {dimension_semantics = [], scalar_prefetch = 0 : i64, scratch_operands = 0 : i64, tpu.core_type = #tpu.core_type<tc>} {
    %c0 = arith.constant 0 : index
    %c0_0 = arith.constant 0 : index
    %0 = vector.load %arg0[%c0, %c0_0] : memref<16x128xf32, #tpu.memory_space<vmem>>, vector<16x128xf32>
    %c0_1 = arith.constant 0 : index
    %c0_2 = arith.constant 0 : index
    %1 = vector.load %arg1[%c0_1, %c0_2] : memref<1x128xf32, #tpu.memory_space<vmem>>, vector<1x128xf32>
    %c0_3 = arith.constant 0 : index
    %c0_4 = arith.constant 0 : index
    %2 = vector.load %arg2[%c0_3, %c0_4] : memref<1x128xf32, #tpu.memory_space<vmem>>, vector<1x128xf32>
    %cst = arith.constant dense<0.000000e+00> : vector<16xf32>
    %3 = vector.multi_reduction <add>, %0, %cst [1] : vector<16x128xf32> to vector<16xf32>
    %4 = vector.shape_cast %3 : vector<16xf32> to vector<16x1xf32>
    %cst_5 = arith.constant 1.280000e+02 : f32
    %5 = vector.broadcast %cst_5 : f32 to vector<16x1xf32>
    %6 = arith.divf %4, %5 : vector<16x1xf32>
    %7 = vector.broadcast %6 : vector<16x1xf32> to vector<16x128xf32>
    %8 = arith.subf %0, %7 : vector<16x128xf32>
    %9 = arith.mulf %8, %8 : vector<16x128xf32>
    %cst_6 = arith.constant dense<0.000000e+00> : vector<16xf32>
    %10 = vector.multi_reduction <add>, %9, %cst_6 [1] : vector<16x128xf32> to vector<16xf32>
    %11 = vector.shape_cast %10 : vector<16xf32> to vector<16x1xf32>
    %cst_7 = arith.constant 1.280000e+02 : f32
    %12 = vector.broadcast %cst_7 : f32 to vector<16x1xf32>
    %13 = arith.divf %11, %12 : vector<16x1xf32>
    %14 = vector.broadcast %6 : vector<16x1xf32> to vector<16x128xf32>
    %15 = arith.subf %0, %14 : vector<16x128xf32>
    %cst_8 = arith.constant 9.99999996E-13 : f32
    %16 = vector.broadcast %cst_8 : f32 to vector<16x1xf32>
    %17 = arith.addf %13, %16 : vector<16x1xf32>
    %18 = math.rsqrt %17 : vector<16x1xf32>
    %19 = vector.broadcast %18 : vector<16x1xf32> to vector<16x128xf32>
    %20 = arith.mulf %15, %19 : vector<16x128xf32>
    %21 = vector.broadcast %1 : vector<1x128xf32> to vector<16x128xf32>
    %22 = arith.mulf %20, %21 : vector<16x128xf32>
    %23 = vector.broadcast %2 : vector<1x128xf32> to vector<16x128xf32>
    %24 = arith.addf %22, %23 : vector<16x128xf32>
    %c0_9 = arith.constant 0 : index
    %c0_10 = arith.constant 0 : index
    %25 = vector.load %arg3[%c0_9, %c0_10] : memref<16x128xf32, #tpu.memory_space<vmem>>, vector<16x128xf32>
    tpu.vector_store %arg3[%c0_9, %c0_10], %24 {strides = array<i32>} : memref<16x128xf32, #tpu.memory_space<vmem>>, vector<16x128xf32>,
    return
  }
}

</mosaic_0001>

<llo_original>
// kernel: tpu_custom_call.1
$region0: #{tpu_custom_call.1}
  #allocation0 [shape = 'u32[]', space=smem, size = 0x4, offset = 0x4, fixed_abs, tag = 'smem constant byte address 0x4 - core index']
  #allocation1 [shape = 'u32[144,128]{1,0:T(1,128)}', space=vmem, size = 0x12000, scoped, tag = 'internal scratch']
  %s0 = inlined_call_operand.hbm [shape: f32[16,128], index: 0, kind: input, shape index: {}]
  %s1 = inlined_call_operand.vmem [shape: f32[1,128], index: 1, kind: input, shape index: {}]
  %s2 = inlined_call_operand.vmem [shape: f32[1,128], index: 2, kind: input, shape index: {}]
  %s3 = inlined_call_operand.hbm [shape: f32[16,128], index: 3, kind: output, shape index: {}]
  %s4 = sld [smem:[#allocation0]]
  $region26: #{tpu_custom_call.1} parent=0
    _
  %s6 = ssub.s32 1, %s4
  %s7 = scalar_select 0, %s6, %s4
  $region1: #{tpu_custom_call.1} parent=0
    #allocation2 [shape = 'u8[8192]{0}', space=vmem, size = 0x2000, scoped, tag = 'input window, operand 0, single buffered']
    #allocation3 [shape = 's32[1]{0}', space=sflag, size = 0x4, scoped, tag = 'scoped memory for tpu_custom_call.1']
    #allocation4 [shape = 's32[1]{0}', space=sflag, size = 0x4, scoped, tag = 'scoped memory for tpu_custom_call.1']
    #allocation5 [shape = 'u8[8192]{0}', space=vmem, size = 0x2000, scoped, tag = 'output window, operand 0, single buffered']
    %8 = vsyncpa [#allocation3], 0
    %9 = vsyncpa [#allocation4], 0
    // Predicated region
    $region2: #{tpu_custom_call.1} parent=1 // pred_check
      _
    $region3: #{tpu_custom_call.1} parent=1 // pred_check_branch
      %11 = sbr.rel (0) target = $region5
    $region4: #{tpu_custom_call.1} parent=1 // pred_region
      %s13 = ssub.s32 256, 256
      %14 = vsyncadd [#allocation3], %s13
      %s15 = sshll.u32 [#allocation2], 4
      %s16 = int_to_ptr.vmem [resolvable:$true] %s15
      %21 = dma.hbm_to_vmem [thread:$0]  %s0, 256, %s16, [#allocation3], 128, 128, 8
    $region5: #{tpu_custom_call.1} parent=1 // pred_fallthru
      _
    // Predicated region
    $region6: #{tpu_custom_call.1} parent=1 // pred_check
      _
    $region7: #{tpu_custom_call.1} parent=1 // pred_check_branch
      %23 = sbr.rel (0) target = $region9
    $region8: #{tpu_custom_call.1} parent=1 // pred_region
      _
    $region9: #{tpu_custom_call.1} parent=1 // pred_fallthru
      _
    // Predicated region
    $region10: #{tpu_custom_call.1} parent=1 // pred_check
      _
    $region11: #{tpu_custom_call.1} parent=1 // pred_check_branch
      %25 = sbr.rel (0) target = $region13
    $region12: #{tpu_custom_call.1} parent=1 // pred_region
      _
    $region13: #{tpu_custom_call.1} parent=1 // pred_fallthru
      _
    // Predicated region
    $region14: #{tpu_custom_call.1} parent=1 // pred_check
      _
    $region15: #{tpu_custom_call.1} parent=1 // pred_check_branch
      %27 = sbr.rel (0) target = $region17
    $region16: #{tpu_custom_call.1} parent=1 // pred_region
      %28 = dma.done [#allocation3], 256
    $region17: #{tpu_custom_call.1} parent=1 // pred_fallthru
      _
    %v29 = vld [vmem:[#allocation2] sm:$0xff]
    %v30 = vld [vmem:[#allocation2 + $0x8] sm:$0xff]
    %v31 = vld [vmem:[%s1] sm:$0x1]
    %v32 = vld [vmem:[%s2] sm:$0x1]
    %33 = vadd.xlane.f32.xlu0 %v29
    %v34 = vpop.xlane.xlu0 %33
    %35 = vadd.xlane.f32.xlu0 %v30
    %v36 = vpop.xlane.xlu0 %35
    %v37 = vrcp.pop 128.0
    %v38 = vmul.f32 %v34, %v37
    %v39 = vmul.f32 %v36, %v37
    %v40 = vsub.f32 %v29, %v38
    %v41 = vsub.f32 %v30, %v39
    %v42 = vmul.f32 %v40, %v40
    %v43 = vmul.f32 %v41, %v41
    %44 = vadd.xlane.f32.xlu0 %v42
    %v45 = vpop.xlane.xlu0 %44
    %46 = vadd.xlane.f32.xlu0 %v43
    %v47 = vpop.xlane.xlu0 %46
    %v48 = vmul.f32 %v45, %v37
    %v49 = vmul.f32 %v47, %v37
    %v50 = vadd.f32 %v48, 1e-12
    %v51 = vadd.f32 %v49, 1e-12
    %v52 = vrsqrt.pop %v50
    %v53 = vrsqrt.pop %v51
    %v54 = vmul.f32 %v40, %v52
    %v55 = vmul.f32 %v41, %v53
    %v57 = vlaneseq
    %v58 = vshrl.u32 %v57, 7
    %v59 = vsub.s32 0, %v58
    %v60 = vrot.slane %v31, %v59
    %v62 = vmul.f32 %v54, %v60
    %v63 = vmul.f32 %v55, %v60
    %v65 = vlaneseq
    %v66 = vshrl.u32 %v65, 7
    %v67 = vsub.s32 0, %v66
    %v68 = vrot.slane %v32, %v67
    %v70 = vadd.f32 %v62, %v68
    %v71 = vadd.f32 %v63, %v68
    %72 = vst [vmem:[#allocation5] sm:$0xff] %v70
    %73 = vst [vmem:[#allocation5 + $0x8] sm:$0xff] %v71
    // Predicated region
    $region18: #{tpu_custom_call.1} parent=1 // pred_check
      _
    $region19: #{tpu_custom_call.1} parent=1 // pred_check_branch
      %75 = sbr.rel (0) target = $region21
    $region20: #{tpu_custom_call.1} parent=1 // pred_region
      %s77 = ssub.s32 256, 256
      %78 = vsyncadd [#allocation4], %s77
      %s79 = sshll.u32 [#allocation5], 4
      %s80 = int_to_ptr.vmem [resolvable:$true] %s79
      %85 = dma.vmem_to_hbm [thread:$0]  %s80, 256, %s3, [#allocation4], 128, 128, 8
    $region21: #{tpu_custom_call.1} parent=1 // pred_fallthru
      _
    // Predicated region
    $region22: #{tpu_custom_call.1} parent=1 // pred_check
      _
    $region23: #{tpu_custom_call.1} parent=1 // pred_check_branch
      %87 = sbr.rel (0) target = $region25
    $region24: #{tpu_custom_call.1} parent=1 // pred_region
      %88 = dma.done [#allocation4], 256
    $region25: #{tpu_custom_call.1} parent=1 // pred_fallthru
      _
    %89 = vsyncpa [#allocation3], 1
    %90 = vsyncpa [#allocation4], 1

</llo_original>
